<compile_context>
chip_gen: v5e
topology: v5e:2x2
jax: 0.10.0
libtpu: 0.0.40
codegen_flags: <defaults>
</compile_context>

<pallas_src>
import functools

import jax
import jax.numpy as jnp
import numpy as np
from jax.experimental import pallas as pl
from jax.experimental.pallas import tpu as pltpu


def _round_up(x, m):
    return ((x + m - 1) // m) * m


def _choose_tile(n_nodes, tile_n):
    """Lane-tile size: multiple of 128, <= tile_n, and (when possible) small
    enough that the grid has >= 2 steps so both v7x TensorCores get work."""
    n128 = _round_up(max(int(n_nodes), 1), 128)
    t = min(int(tile_n), n128)
    if n128 >= 256:
        t = min(t, (n128 // 2) // 128 * 128)
    return max(t, 128)


# ----------------------------------------------------------------------------
# Kernel: unrolled primal forward, lane-dense (nodes on the lane axis).
#   p_0 = 0
#   for b in range(num_blocks):
#       x  = [p, mu / normalized_mu, cons_lvl]         (3 per-node scalars)
#       dp = block_b(x)                                (per-node MLP H->H->1)
#       p  = P_max * sigmoid(p + dp)
#   out[b] = p_b   for b in 0..num_blocks
# All three per-block matmuls (layer 1 augmented with its bias, layer 2,
# readout) run on the MXU with bf16 operands / f32 accumulation.
# ----------------------------------------------------------------------------
def _primal_unrolled_kernel(mu_ref, cons_ref, w1_ref, w2_ref, b2_ref,
                            wo_ref, bo_ref, out_ref, slab_ref,
                            *, num_blocks, p_max, inv_mu):
    mu_n = mu_ref[...] * inv_mu                     # (1, T) f32
    cons = cons_ref[...]                            # (1, T) f32
    p = jnp.zeros_like(mu_n)                        # p_0 = 0

    # Constant slab rows (written once per node tile): [., mu_n, cons, 1, 0..]
    slab_ref[...] = jnp.zeros_like(slab_ref)
    slab_ref[1:2, :] = mu_n
    slab_ref[2:3, :] = cons
    slab_ref[3:4, :] = jnp.ones_like(mu_n)

    out_ref[0:1, :] = p                             # lane-dense store of p_0

    for b in range(num_blocks):                     # static unroll over blocks
        slab_ref[0:1, :] = p                        # only row 0 changes
        slab_b = slab_ref[...].astype(jnp.bfloat16)             # (8, T) bf16
        # layer 1 (+ bias folded into the augmented weight) on the MXU
        h = jnp.dot(w1_ref[b], slab_b,
                    preferred_element_type=jnp.float32)         # (H, T) f32
        h = jnp.maximum(h, 0.0).astype(jnp.bfloat16)
        # layer 2 on the MXU, bias add on the VPU
        h = jnp.dot(w2_ref[b], h,
                    preferred_element_type=jnp.float32) + b2_ref[b]
        h = jnp.maximum(h, 0.0).astype(jnp.bfloat16)
        # readout H -> 1 on the MXU (wo zero-padded to 8 rows; row 0 is real)
        r = jnp.dot(wo_ref[b], h,
                    preferred_element_type=jnp.float32)         # (8, T) f32
        dp = r[0:1, :] + bo_ref[b]                               # (1, T)
        p = p_max * jax.nn.sigmoid(p + dp)
        out_ref[b + 1:b + 2, :] = p                 # lane-dense store of p_b
    # TODO(synk): GNN / PrimalGNN message passing (edge_index_l /
    # edge_weight_l / transmitters_index) is not in the provided source; the
    # per-block model is reduced to a per-node MLP with
    # num_features_list=[3, H, ..., H] and an H->1 readout.
    # TODO(synk): noisy_training (randn_like noise injection) branch omitted;
    # the deterministic forward (noisy_training=False) is reproduced.


# ----------------------------------------------------------------------------
# One-time parameter preparation (hoisted out of the per-call path).
# ----------------------------------------------------------------------------
def prepare_primal_params(params):
    """params: torch-like per-block stacks
         w1 (B,3,H), b1 (B,H), w2 (B,H,H), b2 (B,H), wo (B,H), bo (B,)
    Returns kernel-ready arrays (bf16 MXU operands, f32 biases)."""
    w1, b1, w2, b2, wo, bo = params
    n_b, n_in, hidden = w1.shape
    w1t = jnp.transpose(w1, (0, 2, 1))                          # (B, H, 3)
    pad_cols = 8 - n_in - 1
    w1_aug = jnp.concatenate(
        [w1t, b1[..., None],
         jnp.zeros((n_b, hidden, pad_cols), w1.dtype)], axis=2
    ).astype(jnp.bfloat16)                                      # (B, H, 8)
    w2t = jnp.transpose(w2, (0, 2, 1)).astype(jnp.bfloat16)     # (B, H, H)
    b2c = b2.reshape(n_b, hidden, 1).astype(jnp.float32)        # (B, H, 1)
    wo_pad = jnp.zeros((n_b, 8, hidden), jnp.float32)
    wo_pad = wo_pad.at[:, 0, :].set(wo).astype(jnp.bfloat16)    # (B, 8, H)
    boc = bo.reshape(n_b, 1, 1).astype(jnp.float32)             # (B, 1, 1)
    return (w1_aug, w2t, b2c, wo_pad, boc)


def primal_model_forward(mu, cons_lvl, prepped, *, num_blocks, p_max,
                         normalized_mu, tile_n=2048):
    """mu, cons_lvl: (N, 1) node-major arrays (torch layout).
    prepped: output of prepare_primal_params (call once, reuse per step).
    Returns the stacked (num_blocks+1, N) array [p_0; p_1; ...; p_B]."""
    n_nodes = mu.shape[0]
    w1_aug, w2t, b2c, wo_pad, boc = prepped
    assert w1_aug.shape[0] == num_blocks

    t = _choose_tile(n_nodes, tile_n)
    n_pad = _round_up(n_nodes, t)
    pad = n_pad - n_nodes
    mu_row = jnp.pad(mu.reshape(1, -1).astype(jnp.float32), ((0, 0), (0, pad)))
    cons_row = jnp.pad(cons_lvl.reshape(1, -1).astype(jnp.float32),
                       ((0, 0), (0, pad)))

    kernel = functools.partial(_primal_unrolled_kernel,
                               num_blocks=num_blocks, p_max=float(p_max),
                               inv_mu=float(1.0 / normalized_mu))

    node_spec = lambda: pl.BlockSpec((1, t), lambda i: (0, i))
    w_spec = lambda arr: pl.BlockSpec(arr.shape, lambda i: (0, 0, 0))  # resident

    grid_spec = pltpu.PrefetchScalarGridSpec(
        num_scalar_prefetch=0,
        grid=(n_pad // t,),
        in_specs=[
            node_spec(), node_spec(),      # mu, cons_lvl (lane-dense rows)
            w_spec(w1_aug),                # augmented layer-1 weights (bf16)
            w_spec(w2t),                   # layer-2 weights^T (bf16)
            w_spec(b2c),                   # layer-2 bias (f32)
            w_spec(wo_pad),                # readout weights, padded rows (bf16)
            w_spec(boc),                   # readout bias (f32)
        ],
        out_specs=pl.BlockSpec((num_blocks + 1, t), lambda i: (0, i)),
        scratch_shapes=[pltpu.VMEM((8, t), jnp.float32)],   # input slab
    )

    out = pl.pallas_call(
        kernel,
        out_shape=jax.ShapeDtypeStruct((num_blocks + 1, n_pad), jnp.float32),
        grid_spec=grid_spec,
        compiler_params=pltpu.CompilerParams(
            dimension_semantics=("parallel",)),
    )(mu_row, cons_row, w1_aug, w2t, b2c, wo_pad, boc)
    return out[:, :n_nodes]


# ----------------------------------------------------------------------------
# lagrangian_fn — plain jnp on purpose: at (num_graphs, n) sizes a dedicated
# pallas_call is pure launch/DMA overhead; XLA fuses this reduction for free.
# ----------------------------------------------------------------------------
def lagrangian_fn_jnp(rates, mu, r_min, p=None, metric='rates',
                      constrained_subnetwork=None):
    if rates.shape != r_min.shape:
        r_min = r_min.reshape(rates.shape[0], -1)
    sum_rates = jnp.sum(rates, axis=1)
    sum_power = jnp.sum(p, axis=1) if p is not None else None
    if constrained_subnetwork is not None:
        k = int(np.floor(constrained_subnetwork * rates.shape[1]))
        rates, r_min, mu = rates[:, :k], r_min[:, :k], mu[:, :k]
    if metric == 'rates':
        return -sum_rates + jnp.sum(mu * (r_min - rates), axis=1)
    elif metric == 'power':
        assert p is not None
        return sum_power + jnp.sum(mu * (r_min - rates), axis=1)
    raise ValueError(metric)


# ----------------------------------------------------------------------------
# Driver
# ----------------------------------------------------------------------------
if __name__ == "__main__":
    # args-equivalent config (small shapes; a full 128-lane tile, no padding)
    n = 32                        # args.n (nodes per graph)
    num_graphs = 4                # args.batch_size * args.num_samplers
    N = num_graphs * n            # 128
    hidden = 32                   # args.primal_hidden_size
    num_blocks = 3                # args.primal_num_blocks (unrolled=True)
    P_max = 2.0                   # args.P_max
    mu_max = 10.0                 # args.mu_max
    normalize_mu = True           # args.normalize_mu
    normalized_mu = mu_max if normalize_mu else 1.0
    r_min = 1.5                   # args.r_min
    constrained_subnetwork = 0.5  # args.constrained_subnetwork

    key = jax.random.PRNGKey(0)
    k_mu, k_w = jax.random.split(key)
    mu = jax.random.uniform(k_mu, (N, 1), jnp.float32, 0.0, mu_max)

    # cons_lvl: r_min on the first floor(cs*n) nodes of each graph, 0 elsewhere
    n_con = int(np.floor(constrained_subnetwork * n))
    cons_lvl = jnp.concatenate(
        [r_min * jnp.ones((num_graphs, n_con), jnp.float32),
         jnp.zeros((num_graphs, n - n_con), jnp.float32)], axis=1).reshape(-1, 1)

    # deterministic per-block parameters (torch-like stacks)
    keys = jax.random.split(k_w, 6)
    init = lambda k, shape, scale: scale * jax.random.normal(k, shape, jnp.float32)
    w1s = init(keys[0], (num_blocks, 3, hidden), 1.0 / np.sqrt(3.0))
    b1s = init(keys[1], (num_blocks, hidden), 0.1)
    w2s = init(keys[2], (num_blocks, hidden, hidden), 1.0 / np.sqrt(hidden))
    b2s = init(keys[3], (num_blocks, hidden), 0.1)
    wos = init(keys[4], (num_blocks, hidden), 1.0 / np.sqrt(hidden))
    bos = init(keys[5], (num_blocks,), 0.1)
    params = (w1s, b1s, w2s, b2s, wos, bos)

    # ---- one-time parameter prep (hoisted out of the per-call path) ----
    prepped = jax.tree_util.tree_map(jax.block_until_ready,
                                     prepare_primal_params(params))

    # ---- forward (Pallas) ----
    out_stacked = primal_model_forward(mu, cons_lvl, prepped,
                                       num_blocks=num_blocks, p_max=P_max,
                                       normalized_mu=normalized_mu)
    out_stacked = jax.block_until_ready(out_stacked)   # (num_blocks+1, N)

    # ---- pure-JAX references ----
    def ref_forward(mimic_bf16):
        mu_n = mu / normalized_mu
        p = jnp.zeros_like(mu)
        outs = [p[:, 0]]
        for b in range(num_blocks):
            if mimic_bf16:
                x = jnp.concatenate([p, mu_n, cons_lvl, jnp.ones_like(p)],
                                    axis=1).astype(jnp.bfloat16)       # (N,4)
                w1a = jnp.concatenate([w1s[b], b1s[b][None, :]],
                                      axis=0).astype(jnp.bfloat16)     # (4,H)
                h = jnp.dot(x, w1a, preferred_element_type=jnp.float32)
                h = jnp.maximum(h, 0.0)
                h = jnp.dot(h.astype(jnp.bfloat16), w2s[b].astype(jnp.bfloat16),
                            preferred_element_type=jnp.float32) + b2s[b][None, :]
                h = jnp.maximum(h, 0.0)
                dp = jnp.dot(h.astype(jnp.bfloat16),
                             wos[b].astype(jnp.bfloat16)[:, None],
                             preferred_element_type=jnp.float32) + bos[b]
            else:
                x = jnp.concatenate([p, mu_n, cons_lvl], axis=1)
                h = jnp.maximum(x @ w1s[b] + b1s[b][None, :], 0.0)
                h = jnp.maximum(jnp.dot(h, w2s[b],
                                        preferred_element_type=jnp.float32)
                                + b2s[b][None, :], 0.0)
                dp = h @ wos[b][:, None] + bos[b]
            p = P_max * jax.nn.sigmoid(p + dp)
            outs.append(p[:, 0])
        return outs

    ref_bf16 = ref_forward(True)    # same bf16-operand / f32-acc path as kernel
    ref_f32 = ref_forward(False)    # original full-f32 module semantics
    for b in range(num_blocks + 1):
        np.testing.assert_allclose(np.asarray(out_stacked[b]),
                                   np.asarray(ref_bf16[b]),
                                   rtol=5e-3, atol=5e-3)
        # looser tolerance vs. the pure-f32 reference reflects the bf16 MXU
        # operands used in the kernel (documented bf16 contract).
        np.testing.assert_allclose(np.asarray(out_stacked[b]),
                                   np.asarray(ref_f32[b]),
                                   rtol=5e-2, atol=5e-2)

    # ---- lagrangian_fn check (metric='rates') ----
    rates = jax.random.uniform(jax.random.PRNGKey(1), (num_graphs, n),
                               jnp.float32, 0.0, 3.0)
    mu_g = mu.reshape(num_graphs, n)
    rmin_g = cons_lvl.reshape(num_graphs, n)
    L = jax.block_until_ready(lagrangian_fn_jnp(rates, mu_g, rmin_g,
                                                metric='rates'))
    L_ref = -jnp.sum(rates, axis=1) + jnp.sum(mu_g * (rmin_g - rates), axis=1)
    np.testing.assert_allclose(np.asarray(L), np.asarray(L_ref),
                               rtol=1e-5, atol=1e-5)

    print("KERNEL_OK")
</pallas_src>

<mosaic_0001>
module attributes {stable_mosaic.version = 11 : i64} {
  func.func @_primal_unrolled_kernel(%arg0: i32, %arg1: memref<1x128xf32, #tpu.memory_space<vmem>>, %arg2: memref<1x128xf32, #tpu.memory_space<vmem>>, %arg3: memref<3x32x8xbf16, #tpu.memory_space<vmem>>, %arg4: memref<3x32x32xbf16, #tpu.memory_space<vmem>>, %arg5: memref<3x32x1xf32, #tpu.memory_space<vmem>>, %arg6: memref<3x8x32xbf16, #tpu.memory_space<vmem>>, %arg7: memref<3x1x1xf32, #tpu.memory_space<vmem>>, %arg8: memref<4x128xf32, #tpu.memory_space<vmem>>, %arg9: memref<8x128xf32, #tpu.memory_space<vmem>>) attributes {dimension_semantics = [#tpu.dimension_semantics<parallel>], iteration_bounds = array<i64: 1>, scalar_prefetch = 0 : i64, scratch_operands = 1 : i64, tpu.core_type = #tpu.core_type<tc>, window_params = [{transform_indices = @transform_0, window_bounds = array<i64: 1, 128>}, {transform_indices = @transform_1, window_bounds = array<i64: 1, 128>}, {pipeline_mode = #tpu.pipeline_mode<synchronous>, transform_indices = @transform_2, window_bounds = array<i64: 3, 32, 8>}, {pipeline_mode = #tpu.pipeline_mode<synchronous>, transform_indices = @transform_3, window_bounds = array<i64: 3, 32, 32>}, {pipeline_mode = #tpu.pipeline_mode<synchronous>, transform_indices = @transform_4, window_bounds = array<i64: 3, 32, 1>}, {pipeline_mode = #tpu.pipeline_mode<synchronous>, transform_indices = @transform_5, window_bounds = array<i64: 3, 8, 32>}, {pipeline_mode = #tpu.pipeline_mode<synchronous>, transform_indices = @transform_6, window_bounds = array<i64: 3, 1, 1>}, {transform_indices = @transform_7, window_bounds = array<i64: 4, 128>}]} {
    %c0 = arith.constant 0 : index
    %c0_0 = arith.constant 0 : index
    %0 = vector.load %arg1[%c0, %c0_0] : memref<1x128xf32, #tpu.memory_space<vmem>>, vector<1x128xf32>
    %cst = arith.constant 1.000000e-01 : f32
    %1 = vector.broadcast %cst : f32 to vector<1x128xf32>
    %2 = arith.mulf %0, %1 : vector<1x128xf32>
    %c0_1 = arith.constant 0 : index
    %c0_2 = arith.constant 0 : index
    %3 = vector.load %arg2[%c0_1, %c0_2] : memref<1x128xf32, #tpu.memory_space<vmem>>, vector<1x128xf32>
    %cst_3 = arith.constant 0.000000e+00 : f32
    %4 = vector.broadcast %cst_3 : f32 to vector<1x128xf32>
    %cst_4 = arith.constant 0.000000e+00 : f32
    %5 = vector.broadcast %cst_4 : f32 to vector<8x128xf32>
    %c0_5 = arith.constant 0 : index
    %c0_6 = arith.constant 0 : index
    %6 = vector.load %arg9[%c0_5, %c0_6] : memref<8x128xf32, #tpu.memory_space<vmem>>, vector<8x128xf32>
    tpu.vector_store %arg9[%c0_5, %c0_6], %5 {strides = array<i32>} : memref<8x128xf32, #tpu.memory_space<vmem>>, vector<8x128xf32>,
    %c1 = arith.constant 1 : index
    %c0_7 = arith.constant 0 : index
    %7 = vector.load %arg9[%c1, %c0_7] : memref<8x128xf32, #tpu.memory_space<vmem>>, vector<1x128xf32>
    tpu.vector_store %arg9[%c1, %c0_7], %2 {strides = array<i32>} : memref<8x128xf32, #tpu.memory_space<vmem>>, vector<1x128xf32>,
    %c2 = arith.constant 2 : index
    %c0_8 = arith.constant 0 : index
    %8 = vector.load %arg9[%c2, %c0_8] : memref<8x128xf32, #tpu.memory_space<vmem>>, vector<1x128xf32>
    tpu.vector_store %arg9[%c2, %c0_8], %3 {strides = array<i32>} : memref<8x128xf32, #tpu.memory_space<vmem>>, vector<1x128xf32>,
    %cst_9 = arith.constant 1.000000e+00 : f32
    %9 = vector.broadcast %cst_9 : f32 to vector<1x128xf32>
    %c3 = arith.constant 3 : index
    %c0_10 = arith.constant 0 : index
    %10 = vector.load %arg9[%c3, %c0_10] : memref<8x128xf32, #tpu.memory_space<vmem>>, vector<1x128xf32>
    tpu.vector_store %arg9[%c3, %c0_10], %9 {strides = array<i32>} : memref<8x128xf32, #tpu.memory_space<vmem>>, vector<1x128xf32>,
    %c0_11 = arith.constant 0 : index
    %c0_12 = arith.constant 0 : index
    %11 = vector.load %arg8[%c0_11, %c0_12] : memref<4x128xf32, #tpu.memory_space<vmem>>, vector<1x128xf32>
    tpu.vector_store %arg8[%c0_11, %c0_12], %4 {strides = array<i32>} : memref<4x128xf32, #tpu.memory_space<vmem>>, vector<1x128xf32>,
    %c0_13 = arith.constant 0 : index
    %c0_14 = arith.constant 0 : index
    %12 = vector.load %arg9[%c0_13, %c0_14] : memref<8x128xf32, #tpu.memory_space<vmem>>, vector<1x128xf32>
    tpu.vector_store %arg9[%c0_13, %c0_14], %4 {strides = array<i32>} : memref<8x128xf32, #tpu.memory_space<vmem>>, vector<1x128xf32>,
    %c0_15 = arith.constant 0 : index
    %c0_16 = arith.constant 0 : index
    %13 = vector.load %arg9[%c0_15, %c0_16] : memref<8x128xf32, #tpu.memory_space<vmem>>, vector<8x128xf32>
    %14 = arith.truncf %13 : vector<8x128xf32> to vector<8x128xbf16>
    %c0_17 = arith.constant 0 : index
    %c0_18 = arith.constant 0 : index
    %c0_19 = arith.constant 0 : index
    %15 = vector.load %arg3[%c0_17, %c0_18, %c0_19] : memref<3x32x8xbf16, #tpu.memory_space<vmem>>, vector<1x32x8xbf16>
    %16 = vector.shape_cast %15 : vector<1x32x8xbf16> to vector<32x8xbf16>
    %cst_20 = arith.constant dense<0.000000e+00> : vector<32x128xf32>
    %17 = tpu.matmul %16, %14, %cst_20 {dimension_numbers = #tpu.dot_dimension_numbers<[1], [0], [0], [1], [0, 0, 1, 1], [], []>} : vector<32x8xbf16>, vector<8x128xbf16>, vector<32x128xf32> -> vector<32x128xf32>
    %cst_21 = arith.constant 0.000000e+00 : f32
    %18 = vector.broadcast %cst_21 : f32 to vector<32x128xf32>
    %19 = arith.maximumf %17, %18 : vector<32x128xf32>
    %20 = arith.truncf %19 : vector<32x128xf32> to vector<32x128xbf16>
    %c0_22 = arith.constant 0 : index
    %c0_23 = arith.constant 0 : index
    %c0_24 = arith.constant 0 : index
    %21 = vector.load %arg4[%c0_22, %c0_23, %c0_24] : memref<3x32x32xbf16, #tpu.memory_space<vmem>>, vector<1x32x32xbf16>
    %22 = vector.shape_cast %21 : vector<1x32x32xbf16> to vector<32x32xbf16>
    %cst_25 = arith.constant dense<0.000000e+00> : vector<32x128xf32>
    %23 = tpu.matmul %22, %20, %cst_25 {dimension_numbers = #tpu.dot_dimension_numbers<[1], [0], [0], [1], [0, 0, 1, 1], [], []>} : vector<32x32xbf16>, vector<32x128xbf16>, vector<32x128xf32> -> vector<32x128xf32>
    %c0_26 = arith.constant 0 : index
    %c0_27 = arith.constant 0 : index
    %c0_28 = arith.constant 0 : index
    %24 = vector.load %arg5[%c0_26, %c0_27, %c0_28] : memref<3x32x1xf32, #tpu.memory_space<vmem>>, vector<1x32x1xf32>
    %25 = vector.shape_cast %24 : vector<1x32x1xf32> to vector<32x1xf32>
    %26 = vector.broadcast %25 : vector<32x1xf32> to vector<32x128xf32>
    %27 = arith.addf %23, %26 : vector<32x128xf32>
    %cst_29 = arith.constant 0.000000e+00 : f32
    %28 = vector.broadcast %cst_29 : f32 to vector<32x128xf32>
    %29 = arith.maximumf %27, %28 : vector<32x128xf32>
    %30 = arith.truncf %29 : vector<32x128xf32> to vector<32x128xbf16>
    %c0_30 = arith.constant 0 : index
    %c0_31 = arith.constant 0 : index
    %c0_32 = arith.constant 0 : index
    %31 = vector.load %arg6[%c0_30, %c0_31, %c0_32] : memref<3x8x32xbf16, #tpu.memory_space<vmem>>, vector<1x8x32xbf16>
    %32 = vector.shape_cast %31 : vector<1x8x32xbf16> to vector<8x32xbf16>
    %cst_33 = arith.constant dense<0.000000e+00> : vector<8x128xf32>
    %33 = tpu.matmul %32, %30, %cst_33 {dimension_numbers = #tpu.dot_dimension_numbers<[1], [0], [0], [1], [0, 0, 1, 1], [], []>} : vector<8x32xbf16>, vector<32x128xbf16>, vector<8x128xf32> -> vector<8x128xf32>
    %34 = vector.extract_strided_slice %33 {offsets = [0, 0], sizes = [1, 128], strides = [1, 1]} : vector<8x128xf32> to vector<1x128xf32>
    %c0_34 = arith.constant 0 : index
    %c0_35 = arith.constant 0 : index
    %c0_36 = arith.constant 0 : index
    %35 = vector.load %arg7[%c0_34, %c0_35, %c0_36] : memref<3x1x1xf32, #tpu.memory_space<vmem>>, vector<1x1x1xf32>
    %36 = vector.shape_cast %35 : vector<1x1x1xf32> to vector<1x1xf32>
    %37 = vector.broadcast %36 : vector<1x1xf32> to vector<1x128xf32>
    %38 = arith.addf %34, %37 : vector<1x128xf32>
    %39 = arith.addf %4, %38 : vector<1x128xf32>
    %40 = arith.negf %39 : vector<1x128xf32>
    %41 = math.exp %40 : vector<1x128xf32>
    %cst_37 = arith.constant 1.000000e+00 : f32
    %42 = vector.broadcast %cst_37 : f32 to vector<1x128xf32>
    %43 = arith.addf %42, %41 : vector<1x128xf32>
    %44 = arith.divf %42, %43 : vector<1x128xf32>
    %cst_38 = arith.constant 2.000000e+00 : f32
    %45 = vector.broadcast %cst_38 : f32 to vector<1x128xf32>
    %46 = arith.mulf %45, %44 : vector<1x128xf32>
    %c1_39 = arith.constant 1 : index
    %c0_40 = arith.constant 0 : index
    %47 = vector.load %arg8[%c1_39, %c0_40] : memref<4x128xf32, #tpu.memory_space<vmem>>, vector<1x128xf32>
    tpu.vector_store %arg8[%c1_39, %c0_40], %46 {strides = array<i32>} : memref<4x128xf32, #tpu.memory_space<vmem>>, vector<1x128xf32>,
    %c0_41 = arith.constant 0 : index
    %c0_42 = arith.constant 0 : index
    %48 = vector.load %arg9[%c0_41, %c0_42] : memref<8x128xf32, #tpu.memory_space<vmem>>, vector<1x128xf32>
    tpu.vector_store %arg9[%c0_41, %c0_42], %46 {strides = array<i32>} : memref<8x128xf32, #tpu.memory_space<vmem>>, vector<1x128xf32>,
    %c0_43 = arith.constant 0 : index
    %c0_44 = arith.constant 0 : index
    %49 = vector.load %arg9[%c0_43, %c0_44] : memref<8x128xf32, #tpu.memory_space<vmem>>, vector<8x128xf32>
    %50 = arith.truncf %49 : vector<8x128xf32> to vector<8x128xbf16>
    %c1_45 = arith.constant 1 : index
    %c0_46 = arith.constant 0 : index
    %c0_47 = arith.constant 0 : index
    %51 = vector.load %arg3[%c1_45, %c0_46, %c0_47] : memref<3x32x8xbf16, #tpu.memory_space<vmem>>, vector<1x32x8xbf16>
    %52 = vector.shape_cast %51 : vector<1x32x8xbf16> to vector<32x8xbf16>
    %cst_48 = arith.constant dense<0.000000e+00> : vector<32x128xf32>
    %53 = tpu.matmul %52, %50, %cst_48 {dimension_numbers = #tpu.dot_dimension_numbers<[1], [0], [0], [1], [0, 0, 1, 1], [], []>} : vector<32x8xbf16>, vector<8x128xbf16>, vector<32x128xf32> -> vector<32x128xf32>
    %cst_49 = arith.constant 0.000000e+00 : f32
    %54 = vector.broadcast %cst_49 : f32 to vector<32x128xf32>
    %55 = arith.maximumf %53, %54 : vector<32x128xf32>
    %56 = arith.truncf %55 : vector<32x128xf32> to vector<32x128xbf16>
    %c1_50 = arith.constant 1 : index
    %c0_51 = arith.constant 0 : index
    %c0_52 = arith.constant 0 : index
    %57 = vector.load %arg4[%c1_50, %c0_51, %c0_52] : memref<3x32x32xbf16, #tpu.memory_space<vmem>>, vector<1x32x32xbf16>
    %58 = vector.shape_cast %57 : vector<1x32x32xbf16> to vector<32x32xbf16>
    %cst_53 = arith.constant dense<0.000000e+00> : vector<32x128xf32>
    %59 = tpu.matmul %58, %56, %cst_53 {dimension_numbers = #tpu.dot_dimension_numbers<[1], [0], [0], [1], [0, 0, 1, 1], [], []>} : vector<32x32xbf16>, vector<32x128xbf16>, vector<32x128xf32> -> vector<32x128xf32>
    %c1_54 = arith.constant 1 : index
    %c0_55 = arith.constant 0 : index
    %c0_56 = arith.constant 0 : index
    %60 = vector.load %arg5[%c1_54, %c0_55, %c0_56] : memref<3x32x1xf32, #tpu.memory_space<vmem>>, vector<1x32x1xf32>
    %61 = vector.shape_cast %60 : vector<1x32x1xf32> to vector<32x1xf32>
    %62 = vector.broadcast %61 : vector<32x1xf32> to vector<32x128xf32>
    %63 = arith.addf %59, %62 : vector<32x128xf32>
    %cst_57 = arith.constant 0.000000e+00 : f32
    %64 = vector.broadcast %cst_57 : f32 to vector<32x128xf32>
    %65 = arith.maximumf %63, %64 : vector<32x128xf32>
    %66 = arith.truncf %65 : vector<32x128xf32> to vector<32x128xbf16>
    %c1_58 = arith.constant 1 : index
    %c0_59 = arith.constant 0 : index
    %c0_60 = arith.constant 0 : index
    %67 = vector.load %arg6[%c1_58, %c0_59, %c0_60] : memref<3x8x32xbf16, #tpu.memory_space<vmem>>, vector<1x8x32xbf16>
    %68 = vector.shape_cast %67 : vector<1x8x32xbf16> to vector<8x32xbf16>
    %cst_61 = arith.constant dense<0.000000e+00> : vector<8x128xf32>
    %69 = tpu.matmul %68, %66, %cst_61 {dimension_numbers = #tpu.dot_dimension_numbers<[1], [0], [0], [1], [0, 0, 1, 1], [], []>} : vector<8x32xbf16>, vector<32x128xbf16>, vector<8x128xf32> -> vector<8x128xf32>
    %70 = vector.extract_strided_slice %69 {offsets = [0, 0], sizes = [1, 128], strides = [1, 1]} : vector<8x128xf32> to vector<1x128xf32>
    %c1_62 = arith.constant 1 : index
    %c0_63 = arith.constant 0 : index
    %c0_64 = arith.constant 0 : index
    %71 = vector.load %arg7[%c1_62, %c0_63, %c0_64] : memref<3x1x1xf32, #tpu.memory_space<vmem>>, vector<1x1x1xf32>
    %72 = vector.shape_cast %71 : vector<1x1x1xf32> to vector<1x1xf32>
    %73 = vector.broadcast %72 : vector<1x1xf32> to vector<1x128xf32>
    %74 = arith.addf %70, %73 : vector<1x128xf32>
    %75 = arith.addf %46, %74 : vector<1x128xf32>
    %76 = arith.negf %75 : vector<1x128xf32>
    %77 = math.exp %76 : vector<1x128xf32>
    %cst_65 = arith.constant 1.000000e+00 : f32
    %78 = vector.broadcast %cst_65 : f32 to vector<1x128xf32>
    %79 = arith.addf %78, %77 : vector<1x128xf32>
    %80 = arith.divf %78, %79 : vector<1x128xf32>
    %cst_66 = arith.constant 2.000000e+00 : f32
    %81 = vector.broadcast %cst_66 : f32 to vector<1x128xf32>
    %82 = arith.mulf %81, %80 : vector<1x128xf32>
    %c2_67 = arith.constant 2 : index
    %c0_68 = arith.constant 0 : index
    %83 = vector.load %arg8[%c2_67, %c0_68] : memref<4x128xf32, #tpu.memory_space<vmem>>, vector<1x128xf32>
    tpu.vector_store %arg8[%c2_67, %c0_68], %82 {strides = array<i32>} : memref<4x128xf32, #tpu.memory_space<vmem>>, vector<1x128xf32>,
    %c0_69 = arith.constant 0 : index
    %c0_70 = arith.constant 0 : index
    %84 = vector.load %arg9[%c0_69, %c0_70] : memref<8x128xf32, #tpu.memory_space<vmem>>, vector<1x128xf32>
    tpu.vector_store %arg9[%c0_69, %c0_70], %82 {strides = array<i32>} : memref<8x128xf32, #tpu.memory_space<vmem>>, vector<1x128xf32>,
    %c0_71 = arith.constant 0 : index
    %c0_72 = arith.constant 0 : index
    %85 = vector.load %arg9[%c0_71, %c0_72] : memref<8x128xf32, #tpu.memory_space<vmem>>, vector<8x128xf32>
    %86 = arith.truncf %85 : vector<8x128xf32> to vector<8x128xbf16>
    %c2_73 = arith.constant 2 : index
    %c0_74 = arith.constant 0 : index
    %c0_75 = arith.constant 0 : index
    %87 = vector.load %arg3[%c2_73, %c0_74, %c0_75] : memref<3x32x8xbf16, #tpu.memory_space<vmem>>, vector<1x32x8xbf16>
    %88 = vector.shape_cast %87 : vector<1x32x8xbf16> to vector<32x8xbf16>
    %cst_76 = arith.constant dense<0.000000e+00> : vector<32x128xf32>
    %89 = tpu.matmul %88, %86, %cst_76 {dimension_numbers = #tpu.dot_dimension_numbers<[1], [0], [0], [1], [0, 0, 1, 1], [], []>} : vector<32x8xbf16>, vector<8x128xbf16>, vector<32x128xf32> -> vector<32x128xf32>
    %cst_77 = arith.constant 0.000000e+00 : f32
    %90 = vector.broadcast %cst_77 : f32 to vector<32x128xf32>
    %91 = arith.maximumf %89, %90 : vector<32x128xf32>
    %92 = arith.truncf %91 : vector<32x128xf32> to vector<32x128xbf16>
    %c2_78 = arith.constant 2 : index
    %c0_79 = arith.constant 0 : index
    %c0_80 = arith.constant 0 : index
    %93 = vector.load %arg4[%c2_78, %c0_79, %c0_80] : memref<3x32x32xbf16, #tpu.memory_space<vmem>>, vector<1x32x32xbf16>
    %94 = vector.shape_cast %93 : vector<1x32x32xbf16> to vector<32x32xbf16>
    %cst_81 = arith.constant dense<0.000000e+00> : vector<32x128xf32>
    %95 = tpu.matmul %94, %92, %cst_81 {dimension_numbers = #tpu.dot_dimension_numbers<[1], [0], [0], [1], [0, 0, 1, 1], [], []>} : vector<32x32xbf16>, vector<32x128xbf16>, vector<32x128xf32> -> vector<32x128xf32>
    %c2_82 = arith.constant 2 : index
    %c0_83 = arith.constant 0 : index
    %c0_84 = arith.constant 0 : index
    %96 = vector.load %arg5[%c2_82, %c0_83, %c0_84] : memref<3x32x1xf32, #tpu.memory_space<vmem>>, vector<1x32x1xf32>
    %97 = vector.shape_cast %96 : vector<1x32x1xf32> to vector<32x1xf32>
    %98 = vector.broadcast %97 : vector<32x1xf32> to vector<32x128xf32>
    %99 = arith.addf %95, %98 : vector<32x128xf32>
    %cst_85 = arith.constant 0.000000e+00 : f32
    %100 = vector.broadcast %cst_85 : f32 to vector<32x128xf32>
    %101 = arith.maximumf %99, %100 : vector<32x128xf32>
    %102 = arith.truncf %101 : vector<32x128xf32> to vector<32x128xbf16>
    %c2_86 = arith.constant 2 : index
    %c0_87 = arith.constant 0 : index
    %c0_88 = arith.constant 0 : index
    %103 = vector.load %arg6[%c2_86, %c0_87, %c0_88] : memref<3x8x32xbf16, #tpu.memory_space<vmem>>, vector<1x8x32xbf16>
    %104 = vector.shape_cast %103 : vector<1x8x32xbf16> to vector<8x32xbf16>
    %cst_89 = arith.constant dense<0.000000e+00> : vector<8x128xf32>
    %105 = tpu.matmul %104, %102, %cst_89 {dimension_numbers = #tpu.dot_dimension_numbers<[1], [0], [0], [1], [0, 0, 1, 1], [], []>} : vector<8x32xbf16>, vector<32x128xbf16>, vector<8x128xf32> -> vector<8x128xf32>
    %106 = vector.extract_strided_slice %105 {offsets = [0, 0], sizes = [1, 128], strides = [1, 1]} : vector<8x128xf32> to vector<1x128xf32>
    %c2_90 = arith.constant 2 : index
    %c0_91 = arith.constant 0 : index
    %c0_92 = arith.constant 0 : index
    %107 = vector.load %arg7[%c2_90, %c0_91, %c0_92] : memref<3x1x1xf32, #tpu.memory_space<vmem>>, vector<1x1x1xf32>
    %108 = vector.shape_cast %107 : vector<1x1x1xf32> to vector<1x1xf32>
    %109 = vector.broadcast %108 : vector<1x1xf32> to vector<1x128xf32>
    %110 = arith.addf %106, %109 : vector<1x128xf32>
    %111 = arith.addf %82, %110 : vector<1x128xf32>
    %112 = arith.negf %111 : vector<1x128xf32>
    %113 = math.exp %112 : vector<1x128xf32>
    %cst_93 = arith.constant 1.000000e+00 : f32
    %114 = vector.broadcast %cst_93 : f32 to vector<1x128xf32>
    %115 = arith.addf %114, %113 : vector<1x128xf32>
    %116 = arith.divf %114, %115 : vector<1x128xf32>
    %cst_94 = arith.constant 2.000000e+00 : f32
    %117 = vector.broadcast %cst_94 : f32 to vector<1x128xf32>
    %118 = arith.mulf %117, %116 : vector<1x128xf32>
    %c3_95 = arith.constant 3 : index
    %c0_96 = arith.constant 0 : index
    %119 = vector.load %arg8[%c3_95, %c0_96] : memref<4x128xf32, #tpu.memory_space<vmem>>, vector<1x128xf32>
    tpu.vector_store %arg8[%c3_95, %c0_96], %118 {strides = array<i32>} : memref<4x128xf32, #tpu.memory_space<vmem>>, vector<1x128xf32>,
    return
  }
  func.func @transform_0(%arg0: i32) -> (i32, i32) {
    %c0_i32 = arith.constant 0 : i32
    %c0_i32_0 = arith.constant 0 : i32
    return %c0_i32, %arg0 : i32, i32
  }
  func.func @transform_1(%arg0: i32) -> (i32, i32) {
    %c0_i32 = arith.constant 0 : i32
    %c0_i32_0 = arith.constant 0 : i32
    return %c0_i32, %arg0 : i32, i32
  }
  func.func @transform_2(%arg0: i32) -> (i32, i32, i32) {
    %c0_i32 = arith.constant 0 : i32
    %c0_i32_0 = arith.constant 0 : i32
    %c0_i32_1 = arith.constant 0 : i32
    %c0_i32_2 = arith.constant 0 : i32
    return %c0_i32, %c0_i32_0, %c0_i32_1 : i32, i32, i32
  }
  func.func @transform_3(%arg0: i32) -> (i32, i32, i32) {
    %c0_i32 = arith.constant 0 : i32
    %c0_i32_0 = arith.constant 0 : i32
    %c0_i32_1 = arith.constant 0 : i32
    %c0_i32_2 = arith.constant 0 : i32
    return %c0_i32, %c0_i32_0, %c0_i32_1 : i32, i32, i32
  }
  func.func @transform_4(%arg0: i32) -> (i32, i32, i32) {
    %c0_i32 = arith.constant 0 : i32
    %c0_i32_0 = arith.constant 0 : i32
    %c0_i32_1 = arith.constant 0 : i32
    %c0_i32_2 = arith.constant 0 : i32
    return %c0_i32, %c0_i32_0, %c0_i32_1 : i32, i32, i32
  }
  func.func @transform_5(%arg0: i32) -> (i32, i32, i32) {
    %c0_i32 = arith.constant 0 : i32
    %c0_i32_0 = arith.constant 0 : i32
    %c0_i32_1 = arith.constant 0 : i32
    %c0_i32_2 = arith.constant 0 : i32
    return %c0_i32, %c0_i32_0, %c0_i32_1 : i32, i32, i32
  }
  func.func @transform_6(%arg0: i32) -> (i32, i32, i32) {
    %c0_i32 = arith.constant 0 : i32
    %c0_i32_0 = arith.constant 0 : i32
    %c0_i32_1 = arith.constant 0 : i32
    %c0_i32_2 = arith.constant 0 : i32
    return %c0_i32, %c0_i32_0, %c0_i32_1 : i32, i32, i32
  }
  func.func @transform_7(%arg0: i32) -> (i32, i32) {
    %c0_i32 = arith.constant 0 : i32
    %c0_i32_0 = arith.constant 0 : i32
    return %c0_i32, %arg0 : i32, i32
  }
}

</mosaic_0001>

<llo_original>
// kernel: tpu_custom_call.1
$region0: #{tpu_custom_call.1}
  #allocation0 [shape = 'u32[]', space=smem, size = 0x4, offset = 0x4, fixed_abs, tag = 'smem constant byte address 0x4 - core index']
  #allocation1 [shape = 'u32[72,128]{1,0:T(1,128)}', space=vmem, size = 0x9000, scoped, tag = 'internal scratch']
  #allocation2 [shape = 'f32[8,128]{1,0:T(8,128)}', space=vmem, size = 0x1000, scoped, tag = 'scratch operand']
  %s0 = inlined_call_operand.vmem [shape: f32[1,128], index: 0, kind: input, shape index: {}]
  %s1 = inlined_call_operand.vmem [shape: f32[1,128], index: 1, kind: input, shape index: {}]
  %s2 = inlined_call_operand.vmem [shape: bf16[3,32,8], index: 2, kind: input, shape index: {}]
  %s3 = inlined_call_operand.vmem [shape: bf16[3,32,32], index: 3, kind: input, shape index: {}]
  %s4 = inlined_call_operand.vmem [shape: f32[3,32,1], index: 4, kind: input, shape index: {}]
  %s5 = inlined_call_operand.vmem [shape: bf16[3,8,32], index: 5, kind: input, shape index: {}]
  %s6 = inlined_call_operand.vmem [shape: f32[3,1,1], index: 6, kind: input, shape index: {}]
  %s7 = inlined_call_operand.hbm [shape: f32[4,128], index: 7, kind: output, shape index: {}]
  %s8 = sld [smem:[#allocation0]]
  $region38: #{tpu_custom_call.1} parent=0
    _
  %s10 = ssub.s32 1, %s8
  %s11 = scalar_select 0, %s10, %s8
  $region1: #{tpu_custom_call.1} parent=0
    #allocation3 [shape = 'u8[2048]{0}', space=vmem, size = 0x800, scoped, tag = 'output window, operand 0, single buffered']
    #allocation4 [shape = 's32[1]{0}', space=sflag, size = 0x4, scoped, tag = 'scoped memory for tpu_custom_call.1']
    %12 = vsyncpa [#allocation4], 0
    // Predicated region
    $region2: #{tpu_custom_call.1} parent=1 // pred_check
      _
    $region3: #{tpu_custom_call.1} parent=1 // pred_check_branch
      %14 = sbr.rel (0) target = $region5
    $region4: #{tpu_custom_call.1} parent=1 // pred_region
      _
    $region5: #{tpu_custom_call.1} parent=1 // pred_fallthru
      _
    // Predicated region
    $region6: #{tpu_custom_call.1} parent=1 // pred_check
      _
    $region7: #{tpu_custom_call.1} parent=1 // pred_check_branch
      %16 = sbr.rel (0) target = $region9
    $region8: #{tpu_custom_call.1} parent=1 // pred_region
      _
    $region9: #{tpu_custom_call.1} parent=1 // pred_fallthru
      _
    // Predicated region
    $region10: #{tpu_custom_call.1} parent=1 // pred_check
      _
    $region11: #{tpu_custom_call.1} parent=1 // pred_check_branch
      %18 = sbr.rel (0) target = $region13
    $region12: #{tpu_custom_call.1} parent=1 // pred_region
      _
    $region13: #{tpu_custom_call.1} parent=1 // pred_fallthru
      _
    // Predicated region
    $region14: #{tpu_custom_call.1} parent=1 // pred_check
      _
    $region15: #{tpu_custom_call.1} parent=1 // pred_check_branch
      %20 = sbr.rel (0) target = $region17
    $region16: #{tpu_custom_call.1} parent=1 // pred_region
      _
    $region17: #{tpu_custom_call.1} parent=1 // pred_fallthru
      _
    // Predicated region
    $region18: #{tpu_custom_call.1} parent=1 // pred_check
      _
    $region19: #{tpu_custom_call.1} parent=1 // pred_check_branch
      %22 = sbr.rel (0) target = $region21
    $region20: #{tpu_custom_call.1} parent=1 // pred_region
      _
    $region21: #{tpu_custom_call.1} parent=1 // pred_fallthru
      _
    // Predicated region
    $region22: #{tpu_custom_call.1} parent=1 // pred_check
      _
    $region23: #{tpu_custom_call.1} parent=1 // pred_check_branch
      %24 = sbr.rel (0) target = $region25
    $region24: #{tpu_custom_call.1} parent=1 // pred_region
      _
    $region25: #{tpu_custom_call.1} parent=1 // pred_fallthru
      _
    // Predicated region
    $region26: #{tpu_custom_call.1} parent=1 // pred_check
      _
    $region27: #{tpu_custom_call.1} parent=1 // pred_check_branch
      %26 = sbr.rel (0) target = $region29
    $region28: #{tpu_custom_call.1} parent=1 // pred_region
      _
    $region29: #{tpu_custom_call.1} parent=1 // pred_fallthru
      _
    %v28 = vld [vmem:[%s0] sm:$0x1]
    %v29 = vmul.f32 %v28, 0.1
    %v30 = vld [vmem:[%s1] sm:$0x1]
    %31 = vst [vmem:[#allocation2] sm:$0xff] 0.0
    %32 = vst [vmem:[#allocation2 + $0x1] sm:$0x1] %v29
    %33 = vst [vmem:[#allocation2 + $0x2] sm:$0x1] %v30
    %34 = vst [vmem:[#allocation2 + $0x3] sm:$0x1] 1.0
    %35 = vst [vmem:[#allocation3] sm:$0x1] 0.0
    %36 = vst [vmem:[#allocation2] sm:$0x1] 0.0
    %v37 = vld [vmem:[#allocation2] sm:$0xff]
    %v38 = vpack.c.bf16 %v37, %v37
    %v39 = vld [vmem:[%s2] sm:$0xf]
    %v40 = vld [vmem:[%s2 + $0x4] sm:$0xf]
    %v41 = vld [vmem:[%s2 + $0x8] sm:$0xf]
    %v42 = vld [vmem:[%s2 + $0xc] sm:$0xf]
    %v47 = vunpack.c.l.b16 %v39
    %v48 = vunpack.c.l.b16 %v40
    %v49 = vunpack.c.l.b16 %v41
    %v50 = vunpack.c.l.b16 %v42
    %v51 = vpack.c.b16 %v48, %v47
    %v52 = vpack.c.b16 %v50, %v49
    %vm53 = vcmask 64512
    %v55 = vsel %vm53, %v51, 0
    %v58 = vsel %vm53, %v52, 0
    %vm60 = vcmask 1043456
    %v62 = vsel %vm60, %v38, 0
    %64 = vmatpush.bf16.msra.mxu0 0
    %65 = vmatpush.bf16.msra.mxu0 0
    %66 = vmatpush.bf16.msra.mxu0 0
    %67 = vmatpush.bf16.msra.mxu0 0
    %68 = vmatpush.bf16.msra.mxu0 0
    %69 = vmatpush.bf16.msra.mxu0 0
    %70 = vmatpush.bf16.msra.mxu0 0
    %71 = vmatpush.bf16.msra.mxu0 %v62
    %72 = vmatmul.bf16.gmra.mxu0 %v55
    %v73 = vpop.f32.mrf.mxu0
    %v74 = vadd.f32 0.0, %v73
    %v75 = vpop.f32.mrf.mxu0
    %v76 = vadd.f32 0.0, %v75
    %77 = vmatmul.bf16.gmra.mxu0 %v58
    %v78 = vpop.f32.mrf.mxu0
    %v79 = vadd.f32 0.0, %v78
    %v80 = vpop.f32.mrf.mxu0
    %v81 = vadd.f32 0.0, %v80
    %82 = vdwg.mxu0
    %v83 = vmax.f32 %v74, 0.0
    %v84 = vmax.f32 %v76, 0.0
    %v85 = vmax.f32 %v79, 0.0
    %v86 = vmax.f32 %v81, 0.0
    %v87 = vpack.c.bf16 %v84, %v83
    %v88 = vpack.c.bf16 %v86, %v85
    %v89 = vld [vmem:[%s3] sm:$0xf]
    %v90 = vld [vmem:[%s3 + $0x4] sm:$0xf]
    %v91 = vld [vmem:[%s3 + $0x8] sm:$0xf]
    %v92 = vld [vmem:[%s3 + $0xc] sm:$0xf]
    %v93 = vld [vmem:[%s4] sm:$0xff]
    %v94 = vld [vmem:[%s4 + $0x8] sm:$0xff]
    %v95 = vld [vmem:[%s4 + $0x10] sm:$0xff]
    %v96 = vld [vmem:[%s4 + $0x18] sm:$0xff]
    %98 = vset.pattern.permute.xlu0 0
    %99 = vperm.xlu0 %98, %v93
    %v100 = vpop.permute.xlu0 %99
    %103 = vset.pattern.permute.xlu0 0
    %104 = vperm.xlu0 %103, %v94
    %v105 = vpop.permute.xlu0 %104
    %108 = vset.pattern.permute.xlu0 0
    %109 = vperm.xlu0 %108, %v95
    %v110 = vpop.permute.xlu0 %109
    %113 = vset.pattern.permute.xlu0 0
    %114 = vperm.xlu0 %113, %v96
    %v115 = vpop.permute.xlu0 %114
    %v121 = vunpack.c.l.b16 %v89
    %v122 = vunpack.c.l.b16 %v90
    %v123 = vunpack.c.l.b16 %v91
    %v124 = vunpack.c.l.b16 %v92
    %v125 = vpack.c.b16 %v122, %v121
    %v126 = vpack.c.b16 %v124, %v123
    %vm127 = vcmask 261120
    %v129 = vsel %vm127, %v125, 0
    %v132 = vsel %vm127, %v126, 0
    %134 = vmatpush.bf16.msra.mxu0 0
    %135 = vmatpush.bf16.msra.mxu0 0
    %136 = vmatpush.bf16.msra.mxu0 0
    %137 = vmatpush.bf16.msra.mxu0 0
    %138 = vmatpush.bf16.msra.mxu0 0
    %139 = vmatpush.bf16.msra.mxu0 0
    %140 = vmatpush.bf16.msra.mxu0 %v88
    %141 = vmatpush.bf16.msra.mxu0 %v87
    %142 = vmatmul.bf16.gmra.mxu0 %v129
    %v143 = vpop.f32.mrf.mxu0
    %v144 = vadd.f32 %v100, %v143
    %v145 = vpop.f32.mrf.mxu0
    %v146 = vadd.f32 %v105, %v145
    %147 = vmatmul.bf16.gmra.mxu0 %v132
    %v148 = vpop.f32.mrf.mxu0
    %v149 = vadd.f32 %v110, %v148
    %v150 = vpop.f32.mrf.mxu0
    %v151 = vadd.f32 %v115, %v150
    %152 = vdwg.mxu0
    %v153 = vmax.f32 %v144, 0.0
    %v154 = vmax.f32 %v146, 0.0
    %v155 = vmax.f32 %v149, 0.0
    %v156 = vmax.f32 %v151, 0.0
    %v157 = vpack.c.bf16 %v154, %v153
    %v158 = vpack.c.bf16 %v156, %v155
    %v159 = vld [vmem:[%s5] sm:$0xf]
    %v161 = vsel %vm127, %v159, 0
    %163 = vmatpush.bf16.msra.mxu0 0
    %164 = vmatpush.bf16.msra.mxu0 0
    %165 = vmatpush.bf16.msra.mxu0 0
    %166 = vmatpush.bf16.msra.mxu0 0
    %167 = vmatpush.bf16.msra.mxu0 0
    %168 = vmatpush.bf16.msra.mxu0 0
    %169 = vmatpush.bf16.msra.mxu0 %v158
    %170 = vmatpush.bf16.msra.mxu0 %v157
    %171 = vmatmul.bf16.gmra.mxu0 %v161
    %v172 = vpop.f32.mrf.mxu0
    %v173 = vadd.f32 0.0, %v172
    %v174 = vpop.f32.mrf.mxu0
    %175 = vdwg.mxu0
    %v176 = vld [vmem:[%s6] sm:$0x1]
    %178 = vset.pattern.permute.xlu0 0
    %179 = vperm.xlu0 %178, %v176
    %v180 = vpop.permute.xlu0 %179
    %v182 = vperm.slane %v180, 0
    %v183 = vadd.f32 %v173, %v182
    %v184 = vadd.f32 %v183, 0.0
    %v185 = vxor.u32 %v184, 2147483648
    %v186 = vmul.f32 %v185, 1.442695
    %v187 = vpow.pop %v186
    %v188 = vadd.f32 %v187, 1.0
    %v189 = vrcp.pop %v188
    %v190 = vmul.f32 %v188, %v189
    %v191 = vsub.f32 1.0, %v190
    %v192 = vmul.f32 %v189, %v191
    %v193 = vadd.f32 %v189, %v192
    %vm194 = vweird.f32 %v188
    %vm195 = vweird.f32 %v189
    %vm196 = vmor %vm194, %vm195
    %v197 = vsel %vm196, %v189, %v193
    %v198 = vand.u32 2147483647, %v188
    %vm199 = vcmp.eq.f32.partialorder %v198, 8.507059e+37
    %v200 = vand.u32 %v188, 2147483648
    %v201 = vor.u32 1.1754944e-38, %v200
    %v202 = vsel %vm199, %v201, %v197
    %v203 = vmul.f32 1.0, %v202
    %v204 = vmul.f32 %v203, 2.0
    %205 = vst [vmem:[#allocation3 + $0x1] sm:$0x1] %v204
    %206 = vst [vmem:[#allocation2] sm:$0x1] %v204
    %v207 = vld [vmem:[#allocation2] sm:$0xff]
    %v208 = vpack.c.bf16 %v207, %v207
    %s209 = scalar_lea.vmem %s2, 16
    %v210 = vld [vmem:[%s209] sm:$0xf]
    %v211 = vld [vmem:[%s209 + $0x4] sm:$0xf]
    %v212 = vld [vmem:[%s209 + $0x8] sm:$0xf]
    %v213 = vld [vmem:[%s209 + $0xc] sm:$0xf]
    %v218 = vunpack.c.l.b16 %v210
    %v219 = vunpack.c.l.b16 %v211
    %v220 = vunpack.c.l.b16 %v212
    %v221 = vunpack.c.l.b16 %v213
    %v222 = vpack.c.b16 %v219, %v218
    %v223 = vpack.c.b16 %v221, %v220
    %v225 = vsel %vm53, %v222, 0
    %v228 = vsel %vm53, %v223, 0
    %v231 = vsel %vm60, %v208, 0
    %233 = vmatpush.bf16.msra.mxu0 0
    %234 = vmatpush.bf16.msra.mxu0 0
    %235 = vmatpush.bf16.msra.mxu0 0
    %236 = vmatpush.bf16.msra.mxu0 0
    %237 = vmatpush.bf16.msra.mxu0 0
    %238 = vmatpush.bf16.msra.mxu0 0
    %239 = vmatpush.bf16.msra.mxu0 0
    %240 = vmatpush.bf16.msra.mxu0 %v231
    %241 = vmatmul.bf16.gmra.mxu0 %v225
    %v242 = vpop.f32.mrf.mxu0
    %v243 = vadd.f32 0.0, %v242
    %v244 = vpop.f32.mrf.mxu0
    %v245 = vadd.f32 0.0, %v244
    %246 = vmatmul.bf16.gmra.mxu0 %v228
    %v247 = vpop.f32.mrf.mxu0
    %v248 = vadd.f32 0.0, %v247
    %v249 = vpop.f32.mrf.mxu0
    %v250 = vadd.f32 0.0, %v249
    %251 = vdwg.mxu0
    %v252 = vmax.f32 %v243, 0.0
    %v253 = vmax.f32 %v245, 0.0
    %v254 = vmax.f32 %v248, 0.0
    %v255 = vmax.f32 %v250, 0.0
    %v256 = vpack.c.bf16 %v253, %v252
    %v257 = vpack.c.bf16 %v255, %v254
    %s258 = scalar_lea.vmem %s3, 16
    %v259 = vld [vmem:[%s258] sm:$0xf]
    %v260 = vld [vmem:[%s258 + $0x4] sm:$0xf]
    %v261 = vld [vmem:[%s258 + $0x8] sm:$0xf]
    %v262 = vld [vmem:[%s258 + $0xc] sm:$0xf]
    %s263 = scalar_lea.vmem %s4, 32
    %v264 = vld [vmem:[%s263] sm:$0xff]
    %v265 = vld [vmem:[%s263 + $0x8] sm:$0xff]
    %v266 = vld [vmem:[%s263 + $0x10] sm:$0xff]
    %v267 = vld [vmem:[%s263 + $0x18] sm:$0xff]
    %269 = vset.pattern.permute.xlu0 0
    %270 = vperm.xlu0 %269, %v264
    %v271 = vpop.permute.xlu0 %270
    %274 = vset.pattern.permute.xlu0 0
    %275 = vperm.xlu0 %274, %v265
    %v276 = vpop.permute.xlu0 %275
    %279 = vset.pattern.permute.xlu0 0
    %280 = vperm.xlu0 %279, %v266
    %v281 = vpop.permute.xlu0 %280
    %284 = vset.pattern.permute.xlu0 0
    %285 = vperm.xlu0 %284, %v267
    %v286 = vpop.permute.xlu0 %285
    %v292 = vunpack.c.l.b16 %v259
    %v293 = vunpack.c.l.b16 %v260
    %v294 = vunpack.c.l.b16 %v261
    %v295 = vunpack.c.l.b16 %v262
    %v296 = vpack.c.b16 %v293, %v292
    %v297 = vpack.c.b16 %v295, %v294
    %v299 = vsel %vm127, %v296, 0
    %v302 = vsel %vm127, %v297, 0
    %304 = vmatpush.bf16.msra.mxu0 0
    %305 = vmatpush.bf16.msra.mxu0 0
    %306 = vmatpush.bf16.msra.mxu0 0
    %307 = vmatpush.bf16.msra.mxu0 0
    %308 = vmatpush.bf16.msra.mxu0 0
    %309 = vmatpush.bf16.msra.mxu0 0
    %310 = vmatpush.bf16.msra.mxu0 %v257
    %311 = vmatpush.bf16.msra.mxu0 %v256
    %312 = vmatmul.bf16.gmra.mxu0 %v299
    %v313 = vpop.f32.mrf.mxu0
    %v314 = vadd.f32 %v271, %v313
    %v315 = vpop.f32.mrf.mxu0
    %v316 = vadd.f32 %v276, %v315
    %317 = vmatmul.bf16.gmra.mxu0 %v302
    %v318 = vpop.f32.mrf.mxu0
    %v319 = vadd.f32 %v281, %v318
    %v320 = vpop.f32.mrf.mxu0
    %v321 = vadd.f32 %v286, %v320
    %322 = vdwg.mxu0
    %v323 = vmax.f32 %v314, 0.0
    %v324 = vmax.f32 %v316, 0.0
    %v325 = vmax.f32 %v319, 0.0
    %v326 = vmax.f32 %v321, 0.0
    %v327 = vpack.c.bf16 %v324, %v323
    %v328 = vpack.c.bf16 %v326, %v325
    %s329 = scalar_lea.vmem %s5, 4
    %v330 = vld [vmem:[%s329] sm:$0xf]
    %v332 = vsel %vm127, %v330, 0
    %334 = vmatpush.bf16.msra.mxu0 0
    %335 = vmatpush.bf16.msra.mxu0 0
    %336 = vmatpush.bf16.msra.mxu0 0
    %337 = vmatpush.bf16.msra.mxu0 0
    %338 = vmatpush.bf16.msra.mxu0 0
    %339 = vmatpush.bf16.msra.mxu0 0
    %340 = vmatpush.bf16.msra.mxu0 %v328
    %341 = vmatpush.bf16.msra.mxu0 %v327
    %342 = vmatmul.bf16.gmra.mxu0 %v332
    %v343 = vpop.f32.mrf.mxu0
    %v344 = vadd.f32 0.0, %v343
    %v345 = vpop.f32.mrf.mxu0
    %346 = vdwg.mxu0
    %s347 = scalar_lea.vmem %s6, 1
    %v348 = vld [vmem:[%s347] sm:$0x1]
    %350 = vset.pattern.permute.xlu0 0
    %351 = vperm.xlu0 %350, %v348
    %v352 = vpop.permute.xlu0 %351
    %v354 = vperm.slane %v352, 0
    %v355 = vadd.f32 %v344, %v354
    %v356 = vadd.f32 %v204, %v355
    %v357 = vxor.u32 %v356, 2147483648
    %v358 = vmul.f32 %v357, 1.442695
    %v359 = vpow.pop %v358
    %v360 = vadd.f32 %v359, 1.0
    %v361 = vrcp.pop %v360
    %v362 = vmul.f32 %v360, %v361
    %v363 = vsub.f32 1.0, %v362
    %v364 = vmul.f32 %v361, %v363
    %v365 = vadd.f32 %v361, %v364
    %vm366 = vweird.f32 %v360
    %vm367 = vweird.f32 %v361
    %vm368 = vmor %vm366, %vm367
    %v369 = vsel %vm368, %v361, %v365
    %v370 = vand.u32 2147483647, %v360
    %vm371 = vcmp.eq.f32.partialorder %v370, 8.507059e+37
    %v372 = vand.u32 %v360, 2147483648
    %v373 = vor.u32 1.1754944e-38, %v372
    %v374 = vsel %vm371, %v373, %v369
    %v375 = vmul.f32 1.0, %v374
    %v376 = vmul.f32 %v375, 2.0
    %377 = vst [vmem:[#allocation3 + $0x2] sm:$0x1] %v376
    %378 = vst [vmem:[#allocation2] sm:$0x1] %v376
    %v379 = vld [vmem:[#allocation2] sm:$0xff]
    %v380 = vpack.c.bf16 %v379, %v379
    %s381 = scalar_lea.vmem %s2, 32
    %v382 = vld [vmem:[%s381] sm:$0xf]
    %v383 = vld [vmem:[%s381 + $0x4] sm:$0xf]
    %v384 = vld [vmem:[%s381 + $0x8] sm:$0xf]
    %v385 = vld [vmem:[%s381 + $0xc] sm:$0xf]
    %v390 = vunpack.c.l.b16 %v382
    %v391 = vunpack.c.l.b16 %v383
    %v392 = vunpack.c.l.b16 %v384
    %v393 = vunpack.c.l.b16 %v385
    %v394 = vpack.c.b16 %v391, %v390
    %v395 = vpack.c.b16 %v393, %v392
    %v397 = vsel %vm53, %v394, 0
    %v400 = vsel %vm53, %v395, 0
    %v403 = vsel %vm60, %v380, 0
    %405 = vmatpush.bf16.msra.mxu0 0
    %406 = vmatpush.bf16.msra.mxu0 0
    %407 = vmatpush.bf16.msra.mxu0 0
    %408 = vmatpush.bf16.msra.mxu0 0
    %409 = vmatpush.bf16.msra.mxu0 0
    %410 = vmatpush.bf16.msra.mxu0 0
    %411 = vmatpush.bf16.msra.mxu0 0
    %412 = vmatpush.bf16.msra.mxu0 %v403
    %413 = vmatmul.bf16.gmra.mxu0 %v397
    %v414 = vpop.f32.mrf.mxu0
    %v415 = vadd.f32 0.0, %v414
    %v416 = vpop.f32.mrf.mxu0
    %v417 = vadd.f32 0.0, %v416
    %418 = vmatmul.bf16.gmra.mxu0 %v400
    %v419 = vpop.f32.mrf.mxu0
    %v420 = vadd.f32 0.0, %v419
    %v421 = vpop.f32.mrf.mxu0
    %v422 = vadd.f32 0.0, %v421
    %423 = vdwg.mxu0
    %v424 = vmax.f32 %v415, 0.0
    %v425 = vmax.f32 %v417, 0.0
    %v426 = vmax.f32 %v420, 0.0
    %v427 = vmax.f32 %v422, 0.0
    %v428 = vpack.c.bf16 %v425, %v424
    %v429 = vpack.c.bf16 %v427, %v426
    %s430 = scalar_lea.vmem %s3, 32
    %v431 = vld [vmem:[%s430] sm:$0xf]
    %v432 = vld [vmem:[%s430 + $0x4] sm:$0xf]
    %v433 = vld [vmem:[%s430 + $0x8] sm:$0xf]
    %v434 = vld [vmem:[%s430 + $0xc] sm:$0xf]
    %s435 = scalar_lea.vmem %s4, 64
    %v436 = vld [vmem:[%s435] sm:$0xff]
    %v437 = vld [vmem:[%s435 + $0x8] sm:$0xff]
    %v438 = vld [vmem:[%s435 + $0x10] sm:$0xff]
    %v439 = vld [vmem:[%s435 + $0x18] sm:$0xff]
    %441 = vset.pattern.permute.xlu0 0
    %442 = vperm.xlu0 %441, %v436
    %v443 = vpop.permute.xlu0 %442
    %446 = vset.pattern.permute.xlu0 0
    %447 = vperm.xlu0 %446, %v437
    %v448 = vpop.permute.xlu0 %447
    %451 = vset.pattern.permute.xlu0 0
    %452 = vperm.xlu0 %451, %v438
    %v453 = vpop.permute.xlu0 %452
    %456 = vset.pattern.permute.xlu0 0
    %457 = vperm.xlu0 %456, %v439
    %v458 = vpop.permute.xlu0 %457
    %v464 = vunpack.c.l.b16 %v431
    %v465 = vunpack.c.l.b16 %v432
    %v466 = vunpack.c.l.b16 %v433
    %v467 = vunpack.c.l.b16 %v434
    %v468 = vpack.c.b16 %v465, %v464
    %v469 = vpack.c.b16 %v467, %v466
    %v471 = vsel %vm127, %v468, 0
    %v474 = vsel %vm127, %v469, 0
    %476 = vmatpush.bf16.msra.mxu0 0
    %477 = vmatpush.bf16.msra.mxu0 0
    %478 = vmatpush.bf16.msra.mxu0 0
    %479 = vmatpush.bf16.msra.mxu0 0
    %480 = vmatpush.bf16.msra.mxu0 0
    %481 = vmatpush.bf16.msra.mxu0 0
    %482 = vmatpush.bf16.msra.mxu0 %v429
    %483 = vmatpush.bf16.msra.mxu0 %v428
    %484 = vmatmul.bf16.gmra.mxu0 %v471
    %v485 = vpop.f32.mrf.mxu0
    %v486 = vadd.f32 %v443, %v485
    %v487 = vpop.f32.mrf.mxu0
    %v488 = vadd.f32 %v448, %v487
    %489 = vmatmul.bf16.gmra.mxu0 %v474
    %v490 = vpop.f32.mrf.mxu0
    %v491 = vadd.f32 %v453, %v490
    %v492 = vpop.f32.mrf.mxu0
    %v493 = vadd.f32 %v458, %v492
    %494 = vdwg.mxu0
    %v495 = vmax.f32 %v486, 0.0
    %v496 = vmax.f32 %v488, 0.0
    %v497 = vmax.f32 %v491, 0.0
    %v498 = vmax.f32 %v493, 0.0
    %v499 = vpack.c.bf16 %v496, %v495
    %v500 = vpack.c.bf16 %v498, %v497
    %s501 = scalar_lea.vmem %s5, 8
    %v502 = vld [vmem:[%s501] sm:$0xf]
    %v504 = vsel %vm127, %v502, 0
    %506 = vmatpush.bf16.msra.mxu0 0
    %507 = vmatpush.bf16.msra.mxu0 0
    %508 = vmatpush.bf16.msra.mxu0 0
    %509 = vmatpush.bf16.msra.mxu0 0
    %510 = vmatpush.bf16.msra.mxu0 0
    %511 = vmatpush.bf16.msra.mxu0 0
    %512 = vmatpush.bf16.msra.mxu0 %v500
    %513 = vmatpush.bf16.msra.mxu0 %v499
    %514 = vmatmul.bf16.gmra.mxu0 %v504
    %v515 = vpop.f32.mrf.mxu0
    %v516 = vadd.f32 0.0, %v515
    %v517 = vpop.f32.mrf.mxu0
    %518 = vdwg.mxu0
    %s519 = scalar_lea.vmem %s6, 2
    %v520 = vld [vmem:[%s519] sm:$0x1]
    %522 = vset.pattern.permute.xlu0 0
    %523 = vperm.xlu0 %522, %v520
    %v524 = vpop.permute.xlu0 %523
    %v526 = vperm.slane %v524, 0
    %v527 = vadd.f32 %v516, %v526
    %v528 = vadd.f32 %v376, %v527
    %v529 = vxor.u32 %v528, 2147483648
    %v530 = vmul.f32 %v529, 1.442695
    %v531 = vpow.pop %v530
    %v532 = vadd.f32 %v531, 1.0
    %v533 = vrcp.pop %v532
    %v534 = vmul.f32 %v532, %v533
    %v535 = vsub.f32 1.0, %v534
    %v536 = vmul.f32 %v533, %v535
    %v537 = vadd.f32 %v533, %v536
    %vm538 = vweird.f32 %v532
    %vm539 = vweird.f32 %v533
    %vm540 = vmor %vm538, %vm539
    %v541 = vsel %vm540, %v533, %v537
    %v542 = vand.u32 2147483647, %v532
    %vm543 = vcmp.eq.f32.partialorder %v542, 8.507059e+37
    %v544 = vand.u32 %v532, 2147483648
    %v545 = vor.u32 1.1754944e-38, %v544
    %v546 = vsel %vm543, %v545, %v541
    %v547 = vmul.f32 1.0, %v546
    %v548 = vmul.f32 %v547, 2.0
    %549 = vst [vmem:[#allocation3 + $0x3] sm:$0x1] %v548
    // Predicated region
    $region30: #{tpu_custom_call.1} parent=1 // pred_check
      _
    $region31: #{tpu_custom_call.1} parent=1 // pred_check_branch
      %551 = sbr.rel (0) target = $region33
    $region32: #{tpu_custom_call.1} parent=1 // pred_region
      %553 = vsyncadd [#allocation4], 0
      %s555 = sshll.u32 [#allocation3], 4
      %s556 = int_to_ptr.vmem [resolvable:$true] %s555
      %s557 = sshll.u32 %s7, 4
      %s558 = int_to_ptr.hbm [resolvable:$true] %s557
      %560 = dma.vmem_to_hbm [thread:$0]  %s556, 64, %s558, [#allocation4]
    $region33: #{tpu_custom_call.1} parent=1 // pred_fallthru
      _
    // Predicated region
    $region34: #{tpu_custom_call.1} parent=1 // pred_check
      _
    $region35: #{tpu_custom_call.1} parent=1 // pred_check_branch
      %562 = sbr.rel (0) target = $region37
    $region36: #{tpu_custom_call.1} parent=1 // pred_region
      %564 = dma.done [#allocation4], 64
    $region37: #{tpu_custom_call.1} parent=1 // pred_fallthru
      _
    %565 = vsyncpa [#allocation4], 1

</llo_original>
